<compile_context>
chip_gen: v7x
topology: tpu7x:2x2x1
jax: 0.10.0
libtpu: 0.0.40
codegen_flags: <defaults>
</compile_context>

<pallas_src>
import jax
import jax.numpy as jnp
from jax.experimental import pallas as pl
from jax.experimental.pallas import tpu as pltpu


def _round_up(v: int, m: int) -> int:
    return ((v + m - 1) // m) * m


def torchnn_kernel(x_ref, w1_ref, b1_ref, wd_ref, bd_ref, o_ref):
    # Layer 0: nn.Linear(128, 64)  +  Layer 1: nn.ReLU
    # (f32 accumulation on the MXU regardless of the streamed dtype; bias add,
    #  ReLU and everything downstream stay f32 — friendly to v5e's VPU.)
    h = jnp.dot(x_ref[...], w1_ref[...],
                preferred_element_type=jnp.float32) + b1_ref[...]
    h = jnp.maximum(h, 0.0)

    # Layers 2-7 (split_2 -> 2x Linear(64,3) -> combine/cat -> Linear(6,2)
    # -> Softmax(dim=1)) folded at parameter-prep time into a single (64,1)
    # logit-difference dot + sigmoid.
    d = jnp.dot(h, wd_ref[...],
                preferred_element_type=jnp.float32) + bd_ref[...]      # (tb, 1)
    p0 = 1.0 / (1.0 + jnp.exp(-d))                                     # sigmoid

    # out = [p0, 1 - p0]  (no reductions, no masked partial stores per column)
    col = jax.lax.broadcasted_iota(jnp.int32, o_ref.shape, 1)
    o_ref[...] = jnp.where(col == 0, p0, 1.0 - p0).astype(o_ref.dtype)


def fold_params(params, compute_dtype=jnp.float32):
    """One-time parameter preparation (hoisted out of the forward path).

    Folds the split/combine/final-Linear/Softmax stack into a (64,1) weight
    and (1,1) bias, and optionally casts the streamed W1 to bf16 for
    HBM-bound production use (x is cast to match inside torchnn_forward).
    """
    (w1, b1, w2a, b2a, w2b, b2b, w3, b3) = params
    w_fold = jnp.concatenate([w2a, w2b], axis=1) @ w3          # (64, 2)
    b_fold = jnp.concatenate([b2a, b2b], axis=1) @ w3 + b3     # (1, 2)
    # 2-class softmax == sigmoid of the logit difference.
    w_diff = w_fold[:, 0:1] - w_fold[:, 1:2]                   # (64, 1)
    b_diff = b_fold[:, 0:1] - b_fold[:, 1:2]                   # (1, 1)
    w1c = w1 if w1.dtype == compute_dtype else w1.astype(compute_dtype)
    return (w1c, b1, w_diff, b_diff)


def torchnn_forward(x, folded_params, *, block_batch=4096, min_blocks=2):
    """x: (B, 128). folded_params: output of fold_params()."""
    w1, b1, w_diff, b_diff = folded_params
    if x.dtype != w1.dtype:                       # bf16 streaming path
        x = x.astype(w1.dtype)

    B, D = x.shape
    if B < 8:
        # Whole array as a single block (block dims equal full array dims).
        tb = B
    else:
        # Large tile to amortize per-grid-step overhead, but split into at
        # least `min_blocks` blocks so both v7x TensorCores get work.
        tb = min(int(block_batch),
                 _round_up(pl.cdiv(B, max(1, int(min_blocks))), 8))
        tb = max(8, _round_up(tb, 8))
    n_blk = pl.cdiv(B, tb)

    return pl.pallas_call(
        torchnn_kernel,
        out_shape=jax.ShapeDtypeStruct((B, 2), jnp.float32),
        grid=(n_blk,),
        in_specs=[
            pl.BlockSpec((tb, D), lambda i: (i, 0)),        # x: batch-tiled (ragged last block OK)
            pl.BlockSpec(w1.shape, lambda i: (0, 0)),       # W1 (128,64) full block
            pl.BlockSpec(b1.shape, lambda i: (0, 0)),       # b1 (1,64)
            pl.BlockSpec(w_diff.shape, lambda i: (0, 0)),   # w_diff (64,1)
            pl.BlockSpec(b_diff.shape, lambda i: (0, 0)),   # b_diff (1,1)
        ],
        out_specs=pl.BlockSpec((tb, 2), lambda i: (i, 0)),
        compiler_params=pltpu.CompilerParams(
            dimension_semantics=("parallel",)),
    )(x, w1, b1, w_diff, b_diff)


def torchnn_reference(x, params):
    (w1, b1, w2a, b2a, w2b, b2b, w3, b3) = params
    h = jnp.maximum(x @ w1 + b1, 0.0)
    ya = h @ w2a + b2a
    yb = h @ w2b + b2b
    c = jnp.concatenate([ya, yb], axis=1)
    z = c @ w3 + b3
    return jax.nn.softmax(z, axis=1)


def make_params(key):
    """Deterministic PyTorch-style Linear init: U(-1/sqrt(fan_in), +1/sqrt(fan_in))."""
    def linear(kw, kb, fan_in, fan_out):
        bound = float(fan_in) ** -0.5
        w = jax.random.uniform(kw, (fan_in, fan_out), jnp.float32, -bound, bound)
        b = jax.random.uniform(kb, (1, fan_out), jnp.float32, -bound, bound)
        return w, b

    ks = jax.random.split(key, 8)
    w1, b1 = linear(ks[0], ks[1], 128, 64)   # Linear(128, 64)
    w2a, b2a = linear(ks[2], ks[3], 64, 3)   # branch Linear(64, 3)
    w2b, b2b = linear(ks[4], ks[5], 64, 3)   # branch Linear(64, 3)
    w3, b3 = linear(ks[6], ks[7], 6, 2)      # Linear(6, 2) after combine
    return (w1, b1, w2a, b2a, w2b, b2b, w3, b3)


if __name__ == "__main__":
    key = jax.random.PRNGKey(0)
    k_params, k_x1, k_x2, k_x3 = jax.random.split(key, 4)
    params = make_params(k_params)
    folded = fold_params(params)            # f32 test path (bf16 = production option)

    # Docstring shape (100, 128): 2 ragged grid blocks (tb=56), no pad copy.
    x1 = jax.random.normal(k_x1, (100, 128), dtype=jnp.float32)
    out1 = jax.block_until_ready(torchnn_forward(x1, folded))
    ref1 = torchnn_reference(x1, params)
    assert out1.shape == (100, 2)
    assert bool(jnp.allclose(out1, ref1, atol=1e-5, rtol=1e-5))

    # Small aligned batch: single block.
    x2 = jax.random.normal(k_x2, (8, 128), dtype=jnp.float32)
    out2 = jax.block_until_ready(torchnn_forward(x2, folded))
    assert out2.shape == (8, 2)
    assert bool(jnp.allclose(out2, torchnn_reference(x2, params), atol=1e-5, rtol=1e-5))

    # Larger aligned batch: exercises the multi-block parallel grid.
    x3 = jax.random.normal(k_x3, (1024, 128), dtype=jnp.float32)
    out3 = jax.block_until_ready(torchnn_forward(x3, folded))
    assert out3.shape == (1024, 2)
    assert bool(jnp.allclose(out3, torchnn_reference(x3, params), atol=1e-5, rtol=1e-5))

    print("KERNEL_OK")
</pallas_src>

<mosaic_0001>
module attributes {stable_mosaic.version = 11 : i64} {
  func.func @torchnn_kernel(%arg0: i32, %arg1: memref<56x128xf32, #tpu.memory_space<vmem>>, %arg2: memref<128x64xf32, #tpu.memory_space<vmem>>, %arg3: memref<1x64xf32, #tpu.memory_space<vmem>>, %arg4: memref<64x1xf32, #tpu.memory_space<vmem>>, %arg5: memref<1x1xf32, #tpu.memory_space<vmem>>, %arg6: memref<56x2xf32, #tpu.memory_space<vmem>>) attributes {dimension_semantics = [#tpu.dimension_semantics<parallel>], iteration_bounds = array<i64: 2>, scalar_prefetch = 0 : i64, scratch_operands = 0 : i64, tpu.core_type = #tpu.core_type<tc>, window_params = [{transform_indices = @transform_0, window_bounds = array<i64: 56, 128>}, {pipeline_mode = #tpu.pipeline_mode<synchronous>, transform_indices = @transform_1, window_bounds = array<i64: 128, 64>}, {pipeline_mode = #tpu.pipeline_mode<synchronous>, transform_indices = @transform_2, window_bounds = array<i64: 1, 64>}, {pipeline_mode = #tpu.pipeline_mode<synchronous>, transform_indices = @transform_3, window_bounds = array<i64: 64, 1>}, {pipeline_mode = #tpu.pipeline_mode<synchronous>, transform_indices = @transform_4, window_bounds = array<i64: 1, 1>}, {transform_indices = @transform_5, window_bounds = array<i64: 56, 2>}]} {
    %c0 = arith.constant 0 : index
    %c0_0 = arith.constant 0 : index
    %0 = vector.load %arg1[%c0, %c0_0] : memref<56x128xf32, #tpu.memory_space<vmem>>, vector<56x128xf32>
    %c0_1 = arith.constant 0 : index
    %c0_2 = arith.constant 0 : index
    %1 = vector.load %arg2[%c0_1, %c0_2] : memref<128x64xf32, #tpu.memory_space<vmem>>, vector<128x64xf32>
    %cst = arith.constant dense<0.000000e+00> : vector<56x64xf32>
    %2 = tpu.matmul %0, %1, %cst {dimension_numbers = #tpu.dot_dimension_numbers<[1], [0], [0], [1], [0, 0, 1, 1], [], []>} : vector<56x128xf32>, vector<128x64xf32>, vector<56x64xf32> -> vector<56x64xf32>
    %c0_3 = arith.constant 0 : index
    %c0_4 = arith.constant 0 : index
    %3 = vector.load %arg3[%c0_3, %c0_4] : memref<1x64xf32, #tpu.memory_space<vmem>>, vector<1x64xf32>
    %4 = vector.broadcast %3 : vector<1x64xf32> to vector<56x64xf32>
    %5 = arith.addf %2, %4 : vector<56x64xf32>
    %cst_5 = arith.constant 0.000000e+00 : f32
    %6 = vector.broadcast %cst_5 : f32 to vector<56x64xf32>
    %7 = arith.maximumf %5, %6 : vector<56x64xf32>
    %c0_6 = arith.constant 0 : index
    %c0_7 = arith.constant 0 : index
    %8 = vector.load %arg4[%c0_6, %c0_7] : memref<64x1xf32, #tpu.memory_space<vmem>>, vector<64x1xf32>
    %cst_8 = arith.constant dense<0.000000e+00> : vector<56x1xf32>
    %9 = tpu.matmul %7, %8, %cst_8 {dimension_numbers = #tpu.dot_dimension_numbers<[1], [0], [0], [1], [0, 0, 1, 1], [], []>} : vector<56x64xf32>, vector<64x1xf32>, vector<56x1xf32> -> vector<56x1xf32>
    %c0_9 = arith.constant 0 : index
    %c0_10 = arith.constant 0 : index
    %10 = vector.load %arg5[%c0_9, %c0_10] : memref<1x1xf32, #tpu.memory_space<vmem>>, vector<1x1xf32>
    %11 = vector.broadcast %10 : vector<1x1xf32> to vector<56x1xf32>
    %12 = arith.addf %9, %11 : vector<56x1xf32>
    %cst_11 = arith.constant 0.000000e+00 : f32
    %13 = vector.broadcast %cst_11 : f32 to vector<56x1xf32>
    %14 = arith.subf %13, %12 : vector<56x1xf32>
    %15 = math.exp %14 : vector<56x1xf32>
    %cst_12 = arith.constant 1.000000e+00 : f32
    %16 = vector.broadcast %cst_12 : f32 to vector<56x1xf32>
    %17 = arith.addf %16, %15 : vector<56x1xf32>
    %cst_13 = arith.constant 1.000000e+00 : f32
    %18 = vector.broadcast %cst_13 : f32 to vector<56x1xf32>
    %19 = arith.divf %18, %17 : vector<56x1xf32>
    %20 = tpu.iota {dimensions = array<i32: 1>} : vector<56x2xi32>
    %c0_i32 = arith.constant 0 : i32
    %21 = vector.broadcast %c0_i32 : i32 to vector<56x2xi32>
    %22 = arith.cmpi eq, %20, %21 : vector<56x2xi32>
    %cst_14 = arith.constant 1.000000e+00 : f32
    %23 = vector.broadcast %cst_14 : f32 to vector<56x1xf32>
    %24 = arith.subf %23, %19 : vector<56x1xf32>
    %25 = vector.shape_cast %19 : vector<56x1xf32> to vector<56x1xf32>
    %26 = vector.broadcast %25 : vector<56x1xf32> to vector<56x2xf32>
    %27 = vector.shape_cast %24 : vector<56x1xf32> to vector<56x1xf32>
    %28 = vector.broadcast %27 : vector<56x1xf32> to vector<56x2xf32>
    %29 = arith.select %22, %26, %28 : vector<56x2xi1>, vector<56x2xf32>
    %c0_15 = arith.constant 0 : index
    %c0_16 = arith.constant 0 : index
    %30 = vector.load %arg6[%c0_15, %c0_16] : memref<56x2xf32, #tpu.memory_space<vmem>>, vector<56x2xf32>
    tpu.vector_store %arg6[%c0_15, %c0_16], %29 {strides = array<i32>} : memref<56x2xf32, #tpu.memory_space<vmem>>, vector<56x2xf32>,
    return
  }
  func.func @transform_0(%arg0: i32) -> (i32, i32) {
    %c0_i32 = arith.constant 0 : i32
    %c0_i32_0 = arith.constant 0 : i32
    return %arg0, %c0_i32 : i32, i32
  }
  func.func @transform_1(%arg0: i32) -> (i32, i32) {
    %c0_i32 = arith.constant 0 : i32
    %c0_i32_0 = arith.constant 0 : i32
    %c0_i32_1 = arith.constant 0 : i32
    return %c0_i32, %c0_i32_0 : i32, i32
  }
  func.func @transform_2(%arg0: i32) -> (i32, i32) {
    %c0_i32 = arith.constant 0 : i32
    %c0_i32_0 = arith.constant 0 : i32
    %c0_i32_1 = arith.constant 0 : i32
    return %c0_i32, %c0_i32_0 : i32, i32
  }
  func.func @transform_3(%arg0: i32) -> (i32, i32) {
    %c0_i32 = arith.constant 0 : i32
    %c0_i32_0 = arith.constant 0 : i32
    %c0_i32_1 = arith.constant 0 : i32
    return %c0_i32, %c0_i32_0 : i32, i32
  }
  func.func @transform_4(%arg0: i32) -> (i32, i32) {
    %c0_i32 = arith.constant 0 : i32
    %c0_i32_0 = arith.constant 0 : i32
    %c0_i32_1 = arith.constant 0 : i32
    return %c0_i32, %c0_i32_0 : i32, i32
  }
  func.func @transform_5(%arg0: i32) -> (i32, i32) {
    %c0_i32 = arith.constant 0 : i32
    %c0_i32_0 = arith.constant 0 : i32
    return %arg0, %c0_i32 : i32, i32
  }
}

</mosaic_0001>

<llo_original>
// kernel: tpu_custom_call.1
$region0: #{tpu_custom_call.1}
  #allocation0 [shape = 'u32[]', space=smem, size = 0x4, offset = 0x4, fixed_abs, tag = 'smem constant byte address 0x4 - core index']
  #allocation1 [shape = 'u32[144,128]{1,0:T(1,128)}', space=vmem, size = 0x12000, scoped, tag = 'internal scratch']
  #allocation2 [shape = 'f32[1,1]{1,0:T(1,128)S(1)}', space=vmem, size = 0x200, scoped, tag = 'scoped memory for tpu_custom_call.1']
  %s0 = inlined_call_operand.vmem [shape: f32[100,128], index: 0, kind: input, shape index: {}]
  %s1 = inlined_call_operand.vmem [shape: f32[128,64], index: 1, kind: input, shape index: {}]
  %s2 = inlined_call_operand.vmem [shape: f32[1,64], index: 2, kind: input, shape index: {}]
  %s3 = inlined_call_operand.vmem [shape: f32[64,1], index: 3, kind: input, shape index: {}]
  %s4 = inlined_call_operand.<no memory space> [shape: f32[1,1], index: 4, kind: input, shape index: {}]
  %s5 = inlined_call_operand.vmem [shape: f32[100,2], index: 5, kind: output, shape index: {}]
  %s6 = sld [smem:[#allocation0]]
  $region101: #{tpu_custom_call.1} parent=0
    _
  %s8 = ssub.s32 1, %s6
  %s9 = scalar_select 0, %s8, %s6
  %v10 = vstv %s4
  %11 = vst [vmem:[#allocation2] sm:$0x1] %v10
  $region1: #{tpu_custom_call.1} parent=0
    #allocation3 [shape = 'u8[57344]{0}', space=vmem, size = 0xe000, scoped, tag = 'output window, operand 0']
    loop: start=0, step=1, limit=4
    $region2: #{tpu_custom_call.1} parent=1 // loop_pre_header
      _
    $region3: #{tpu_custom_call.1} parent=1 // loop_header
      %s13 = sphi 0, %s17
      %p14 = scmp.ge.s32.totalorder %s13, 4
      %s23 = sphi 0, %s25
      %s26 = sphi 0, %s23
      %s27 = sphi 0, %s26
      %s43 = sphi 0, %s27
      %s47 = sphi 0, %s47
      %s49 = sphi 0, %s47
      %s50 = sphi 0, %s49
      %s64 = sphi 0, %s50
      %s68 = sphi 0, %s68
      %s70 = sphi 0, %s68
      %s71 = sphi 0, %s70
      %s85 = sphi 0, %s71
      %s89 = sphi 0, %s89
      %s91 = sphi 0, %s89
      %s92 = sphi 0, %s91
      %s106 = sphi 0, %s92
      %s110 = sphi 0, %s110
      %s112 = sphi 0, %s110
      %s113 = sphi 0, %s112
      %s127 = sphi 0, %s113
      %s133 = sphi 0, %s135
      %s136 = sphi 0, %s133
      %s137 = sphi 0, %s136
      %s153 = sphi 0, %s137
    $region4: #{tpu_custom_call.1} parent=1 // loop_header_branch
      %16 = sbr.rel (%p14) target = $region8
    $region5: #{tpu_custom_call.1} parent=1 // loop_body
      %s18 = ssub.s32 %s13, 1
      %s19 = ssub.s32 %s13, 2
      %s20 = sadd.s32 %s13, 1
      %s21 = ssub.s32 %s13, %s20
      %p22 = scmp.eq.s32.totalorder %s21, 0
      %s24 = sadd.s32 %s23, 1
      %s25 = scalar_select %p22, %s23, %s24
      %p28 = pneg %p22
      %p29 = scmp.eq.s32.totalorder %s13, 1
      %p30 = por %p28, %p29
      %p31 = scmp.ne.s32.totalorder %s23, %s26
      %p32 = scmp.eq.s32.totalorder %s13, 0
      %p33 = por %p31, %p32
      %p34 = scmp.ne.s32.totalorder %s23, %s26
      %p35 = scmp.eq.s32.totalorder %s18, 1
      %p36 = por %p34, %p35
      %p37 = scmp.ne.s32.totalorder %s26, %s27
      %p38 = scmp.eq.s32.totalorder %s18, 0
      %p39 = por %p37, %p38
      %p40 = scmp.ne.s32.totalorder %s26, %s27
      %p41 = scmp.eq.s32.totalorder %s19, 1
      %p42 = por %p40, %p41
      %p44 = scmp.ne.s32.totalorder %s27, %s43
      %p45 = scmp.eq.s32.totalorder %s19, 0
      %p46 = por %p44, %p45
      %s48 = sadd.s32 %s47, 1
      %p51 = scmp.eq.s32.totalorder %s13, 1
      %p52 = scmp.ne.s32.totalorder %s47, %s49
      %p53 = scmp.eq.s32.totalorder %s13, 0
      %p54 = por %p52, %p53
      %p55 = scmp.ne.s32.totalorder %s47, %s49
      %p56 = scmp.eq.s32.totalorder %s18, 1
      %p57 = por %p55, %p56
      %p58 = scmp.ne.s32.totalorder %s49, %s50
      %p59 = scmp.eq.s32.totalorder %s18, 0
      %p60 = por %p58, %p59
      %p61 = scmp.ne.s32.totalorder %s49, %s50
      %p62 = scmp.eq.s32.totalorder %s19, 1
      %p63 = por %p61, %p62
      %p65 = scmp.ne.s32.totalorder %s50, %s64
      %p66 = scmp.eq.s32.totalorder %s19, 0
      %p67 = por %p65, %p66
      %s69 = sadd.s32 %s68, 1
      %p72 = scmp.eq.s32.totalorder %s13, 1
      %p73 = scmp.ne.s32.totalorder %s68, %s70
      %p74 = scmp.eq.s32.totalorder %s13, 0
      %p75 = por %p73, %p74
      %p76 = scmp.ne.s32.totalorder %s68, %s70
      %p77 = scmp.eq.s32.totalorder %s18, 1
      %p78 = por %p76, %p77
      %p79 = scmp.ne.s32.totalorder %s70, %s71
      %p80 = scmp.eq.s32.totalorder %s18, 0
      %p81 = por %p79, %p80
      %p82 = scmp.ne.s32.totalorder %s70, %s71
      %p83 = scmp.eq.s32.totalorder %s19, 1
      %p84 = por %p82, %p83
      %p86 = scmp.ne.s32.totalorder %s71, %s85
      %p87 = scmp.eq.s32.totalorder %s19, 0
      %p88 = por %p86, %p87
      %s90 = sadd.s32 %s89, 1
      %p93 = scmp.eq.s32.totalorder %s13, 1
      %p94 = scmp.ne.s32.totalorder %s89, %s91
      %p95 = scmp.eq.s32.totalorder %s13, 0
      %p96 = por %p94, %p95
      %p97 = scmp.ne.s32.totalorder %s89, %s91
      %p98 = scmp.eq.s32.totalorder %s18, 1
      %p99 = por %p97, %p98
      %p100 = scmp.ne.s32.totalorder %s91, %s92
      %p101 = scmp.eq.s32.totalorder %s18, 0
      %p102 = por %p100, %p101
      %p103 = scmp.ne.s32.totalorder %s91, %s92
      %p104 = scmp.eq.s32.totalorder %s19, 1
      %p105 = por %p103, %p104
      %p107 = scmp.ne.s32.totalorder %s92, %s106
      %p108 = scmp.eq.s32.totalorder %s19, 0
      %p109 = por %p107, %p108
      %s111 = sadd.s32 %s110, 1
      %p114 = scmp.eq.s32.totalorder %s13, 1
      %p115 = scmp.ne.s32.totalorder %s110, %s112
      %p116 = scmp.eq.s32.totalorder %s13, 0
      %p117 = por %p115, %p116
      %p118 = scmp.ne.s32.totalorder %s110, %s112
      %p119 = scmp.eq.s32.totalorder %s18, 1
      %p120 = por %p118, %p119
      %p121 = scmp.ne.s32.totalorder %s112, %s113
      %p122 = scmp.eq.s32.totalorder %s18, 0
      %p123 = por %p121, %p122
      %p124 = scmp.ne.s32.totalorder %s112, %s113
      %p125 = scmp.eq.s32.totalorder %s19, 1
      %p126 = por %p124, %p125
      %p128 = scmp.ne.s32.totalorder %s113, %s127
      %p129 = scmp.eq.s32.totalorder %s19, 0
      %p130 = por %p128, %p129
      %s131 = ssub.s32 %s13, %s20
      %p132 = scmp.eq.s32.totalorder %s131, 0
      %s134 = sadd.s32 %s133, 1
      %s135 = scalar_select %p132, %s133, %s134
      %p138 = pneg %p132
      %p139 = scmp.eq.s32.totalorder %s13, 1
      %p140 = por %p138, %p139
      %p141 = scmp.ne.s32.totalorder %s133, %s136
      %p142 = scmp.eq.s32.totalorder %s13, 0
      %p143 = por %p141, %p142
      %p144 = scmp.ne.s32.totalorder %s133, %s136
      %p145 = scmp.eq.s32.totalorder %s18, 1
      %p146 = por %p144, %p145
      %p147 = scmp.ne.s32.totalorder %s136, %s137
      %p148 = scmp.eq.s32.totalorder %s18, 0
      %p149 = por %p147, %p148
      %p150 = scmp.ne.s32.totalorder %s136, %s137
      %p151 = scmp.eq.s32.totalorder %s19, 1
      %p152 = por %p150, %p151
      %p154 = scmp.ne.s32.totalorder %s137, %s153
      %p155 = scmp.eq.s32.totalorder %s19, 0
      %p156 = por %p154, %p155
      %p157 = scmp.le.s32.totalorder 1, %s13
      %p158 = scmp.lt.s32.totalorder %s13, 3
      %p159 = pnand %p157, %p158
      %p160 = pneg %p159
      // Predicated region
      $region9: #{tpu_custom_call.1} parent=5 // pred_check
        _
      $region10: #{tpu_custom_call.1} parent=5 // pred_check_branch
        %162 = sbr.rel (%p159) target = $region12
      $region11: #{tpu_custom_call.1} parent=5 // pred_region
        %s163 = ssub.s32 %s13, 1
        // Predicated region
        $region13: #{tpu_custom_call.1} parent=11 // pred_check
          %p164 = pneg %p60
        $region14: #{tpu_custom_call.1} parent=11 // pred_check_branch
          %166 = sbr.rel (%p164) target = $region16
        $region15: #{tpu_custom_call.1} parent=11 // pred_region
          _
        $region16: #{tpu_custom_call.1} parent=11 // pred_fallthru
          _
        // Predicated region
        $region17: #{tpu_custom_call.1} parent=11 // pred_check
          %p167 = pneg %p81
        $region18: #{tpu_custom_call.1} parent=11 // pred_check_branch
          %169 = sbr.rel (%p167) target = $region20
        $region19: #{tpu_custom_call.1} parent=11 // pred_region
          _
        $region20: #{tpu_custom_call.1} parent=11 // pred_fallthru
          _
        // Predicated region
        $region21: #{tpu_custom_call.1} parent=11 // pred_check
          %p170 = pneg %p102
        $region22: #{tpu_custom_call.1} parent=11 // pred_check_branch
          %172 = sbr.rel (%p170) target = $region24
        $region23: #{tpu_custom_call.1} parent=11 // pred_region
          _
        $region24: #{tpu_custom_call.1} parent=11 // pred_fallthru
          _
        // Predicated region
        $region25: #{tpu_custom_call.1} parent=11 // pred_check
          %p173 = pneg %p123
        $region26: #{tpu_custom_call.1} parent=11 // pred_check_branch
          %175 = sbr.rel (%p173) target = $region28
        $region27: #{tpu_custom_call.1} parent=11 // pred_region
          _
        $region28: #{tpu_custom_call.1} parent=11 // pred_fallthru
          _
      $region12: #{tpu_custom_call.1} parent=5 // pred_fallthru
        _
      %p176 = scmp.lt.s32.totalorder %s13, 2
      // Predicated region
      $region29: #{tpu_custom_call.1} parent=5 // pred_check
        %p177 = pneg %p176
      $region30: #{tpu_custom_call.1} parent=5 // pred_check_branch
        %179 = sbr.rel (%p177) target = $region32
      $region31: #{tpu_custom_call.1} parent=5 // pred_region
        // Predicated region
        $region33: #{tpu_custom_call.1} parent=31 // pred_check
          %p180 = pneg %p33
        $region34: #{tpu_custom_call.1} parent=31 // pred_check_branch
          %182 = sbr.rel (%p180) target = $region36
        $region35: #{tpu_custom_call.1} parent=31 // pred_region
          %s183 = smul.u32 7, %s13
          %s184 = ssub.s32 13, %s183
          %p185 = scmp.lt.s32.totalorder %s184, 7
          %s186 = scalar_select %p185, %s184, 7
          %s187 = smul.u32 128, %s186
          %p188 = scmp.lt.s32.totalorder %s183, 12
          %s189 = scalar_select %p188, %s183, 12
          %s190 = smul.addr %s189, 8
          %s191 = scalar_lea.vmem %s0, %s190
          %s192 = smul.u32 7, %s13
          %s193 = ssub.s32 13, %s192
          %p194 = scmp.lt.s32.totalorder %s193, 7
          %s195 = scalar_select %p194, %s193, 7
          %s196 = smul.u32 128, %s195
        $region36: #{tpu_custom_call.1} parent=31 // pred_fallthru
          _
      $region32: #{tpu_custom_call.1} parent=5 // pred_fallthru
        _
      %p197 = scmp.le.s32.totalorder 1, %s13
      %p198 = scmp.lt.s32.totalorder %s13, 3
      %p199 = pnand %p197, %p198
      %p200 = pneg %p199
      // Predicated region
      $region37: #{tpu_custom_call.1} parent=5 // pred_check
        _
      $region38: #{tpu_custom_call.1} parent=5 // pred_check_branch
        %202 = sbr.rel (%p199) target = $region40
      $region39: #{tpu_custom_call.1} parent=5 // pred_region
        %s203 = ssub.s32 %s13, 1
        %s204 = smul.u32 7, %s18
        %s205 = ssub.s32 13, %s204
        %p206 = scmp.lt.s32.totalorder %s205, 7
        %s207 = scalar_select %p206, %s205, 7
        %s208 = smul.u32 128, %s207
        %p209 = scmp.lt.s32.totalorder %s204, 12
        %s210 = scalar_select %p209, %s204, 12
        %s211 = smul.addr %s210, 8
        %s212 = scalar_lea.vmem %s0, %s211
        %p213 = pneg %p39
        %p214 = pneg %p36
        %p215 = pneg %p60
        %p216 = pneg %p57
        %p217 = pneg %p81
        %p218 = pneg %p78
        %p219 = pneg %p102
        %p220 = pneg %p99
        %p221 = pneg %p123
        %p222 = pneg %p120
        %p223 = pneg %p149
        %p224 = pneg %p146
        %s225 = sand.u32 %s136, 1
        %s226 = sand.u32 %s136, 1
        %s227 = smul.addr %s226, 56
        %s228 = scalar_lea.vmem [#allocation3], %s227
        %s229 = smul.u32 7, %s18
        %s230 = ssub.s32 13, %s229
        %p231 = scmp.lt.s32.totalorder %s230, 7
        %s232 = scalar_select %p231, %s230, 7
        %s233 = smul.u32 128, %s232
        %p234 = scmp.lt.s32.totalorder %s229, 12
        %s235 = scalar_select %p234, %s229, 12
        %s236 = smul.addr %s235, 8
        %s237 = scalar_lea.vmem %s0, %s236
        %s238 = smul.u32 7, %s18
        %s239 = ssub.s32 13, %s238
        %p240 = scmp.lt.s32.totalorder %s239, 7
        %s241 = scalar_select %p240, %s239, 7
        %s242 = smul.u32 128, %s241
        %s243 = smul.u32 7, %s18
        %s244 = ssub.s32 13, %s243
        %p245 = scmp.lt.s32.totalorder %s244, 7
        %s246 = scalar_select %p245, %s244, 7
        %s247 = smul.u32 128, %s246
        %v248 = vld [vmem:[%s237] sm:$0xff]
        %v249 = vld [vmem:[%s237 + $0x8] sm:$0xff]
        %v250 = vld [vmem:[%s237 + $0x10] sm:$0xff]
        %v251 = vld [vmem:[%s237 + $0x18] sm:$0xff]
        %v252 = vld [vmem:[%s237 + $0x20] sm:$0xff]
        %v253 = vld [vmem:[%s237 + $0x28] sm:$0xff]
        %v254 = vld [vmem:[%s237 + $0x30] sm:$0xff]
        %v255 = vld [vmem:[%s1] sm:$0xff]
        %v256 = vld [vmem:[%s1 + $0x8] sm:$0xff]
        %v257 = vld [vmem:[%s1 + $0x10] sm:$0xff]
        %v258 = vld [vmem:[%s1 + $0x18] sm:$0xff]
        %v259 = vld [vmem:[%s1 + $0x20] sm:$0xff]
        %v260 = vld [vmem:[%s1 + $0x28] sm:$0xff]
        %v261 = vld [vmem:[%s1 + $0x30] sm:$0xff]
        %v262 = vld [vmem:[%s1 + $0x38] sm:$0xff]
        %v263 = vld [vmem:[%s1 + $0x40] sm:$0xff]
        %v264 = vld [vmem:[%s1 + $0x48] sm:$0xff]
        %v265 = vld [vmem:[%s1 + $0x50] sm:$0xff]
        %v266 = vld [vmem:[%s1 + $0x58] sm:$0xff]
        %v267 = vld [vmem:[%s1 + $0x60] sm:$0xff]
        %v268 = vld [vmem:[%s1 + $0x68] sm:$0xff]
        %v269 = vld [vmem:[%s1 + $0x70] sm:$0xff]
        %v270 = vld [vmem:[%s1 + $0x78] sm:$0xff]
        %v271 = vld [vmem:[%s2] sm:$0x1]
        %v273 = vlaneseq
        %v274 = vshrl.u32 %v273, 7
        %v275 = vsub.s32 0, %v274
        %v276 = vrot.slane %v271, %v275
        %278 = vmatprep.subr.mxu0 0.0
        %279 = vmatpush1.msra.mxu0 %v255
        %280 = vmatprep.subr.mxu0 0.0
        %281 = vmatpush1.msra.mxu0 %v256
        %282 = vmatprep.subr.mxu0 0.0
        %283 = vmatpush1.msra.mxu0 %v257
        %284 = vmatprep.subr.mxu0 0.0
        %285 = vmatpush1.msra.mxu0 %v258
        %286 = vmatprep.subr.mxu0 0.0
        %287 = vmatpush1.msra.mxu0 %v259
        %288 = vmatprep.subr.mxu0 0.0
        %289 = vmatpush1.msra.mxu0 %v260
        %290 = vmatprep.subr.mxu0 0.0
        %291 = vmatpush1.msra.mxu0 %v261
        %292 = vmatprep.subr.mxu0 0.0
        %293 = vmatpush1.msra.mxu0 %v262
        %294 = vmatprep.subr.mxu0 0.0
        %295 = vmatpush1.msra.mxu0 %v263
        %296 = vmatprep.subr.mxu0 0.0
        %297 = vmatpush1.msra.mxu0 %v264
        %298 = vmatprep.subr.mxu0 0.0
        %299 = vmatpush1.msra.mxu0 %v265
        %300 = vmatprep.subr.mxu0 0.0
        %301 = vmatpush1.msra.mxu0 %v266
        %302 = vmatprep.subr.mxu0 0.0
        %303 = vmatpush1.msra.mxu0 %v267
        %304 = vmatprep.subr.mxu0 0.0
        %305 = vmatpush1.msra.mxu0 %v268
        %306 = vmatprep.subr.mxu0 0.0
        %307 = vmatpush1.msra.mxu0 %v269
        %308 = vmatprep.subr.mxu0 0.0
        %309 = vmatpush1.msra.mxu0 %v270
        %310 = vmatprep.subr.mxu0 0.0
        %311 = vmatpush1.msra.mxu0 0.0
        %312 = vmatprep.subr.mxu0 0.0
        %313 = vmatpush1.msra.mxu0 0.0
        %314 = vmatprep.subr.mxu0 0.0
        %315 = vmatpush1.msra.mxu0 0.0
        %316 = vmatprep.subr.mxu0 0.0
        %317 = vmatpush1.msra.mxu0 0.0
        %318 = vmatprep.subr.mxu0 0.0
        %319 = vmatpush1.msra.mxu0 0.0
        %320 = vmatprep.subr.mxu0 0.0
        %321 = vmatpush1.msra.mxu0 0.0
        %322 = vmatprep.subr.mxu0 0.0
        %323 = vmatpush1.msra.mxu0 0.0
        %324 = vmatprep.subr.mxu0 0.0
        %325 = vmatpush1.msra.mxu0 0.0
        %326 = vmatprep.subr.mxu0 0.0
        %327 = vmatpush1.msra.mxu0 0.0
        %328 = vmatprep.subr.mxu0 0.0
        %329 = vmatpush1.msra.mxu0 0.0
        %330 = vmatprep.subr.mxu0 0.0
        %331 = vmatpush1.msra.mxu0 0.0
        %332 = vmatprep.subr.mxu0 0.0
        %333 = vmatpush1.msra.mxu0 0.0
        %334 = vmatprep.subr.mxu0 0.0
        %335 = vmatpush1.msra.mxu0 0.0
        %336 = vmatprep.subr.mxu0 0.0
        %337 = vmatpush1.msra.mxu0 0.0
        %338 = vmatprep.subr.mxu0 0.0
        %339 = vmatpush1.msra.mxu0 0.0
        %340 = vmatprep.subr.mxu0 0.0
        %341 = vmatpush1.msra.mxu0 0.0
        %342 = vmatprep.mubr.f32.mxu0 0.0
        %343 = vmatmul.mubr.f32.gmra.mrb[0].mxu0 %v248
        %v344 = vpop.f32.mrb[0].mxu0
        %v345 = vadd.f32 %v276, %v344
        %v346 = vpop.f32.mrb[0].mxu0
        %347 = vmatprep.mubr.f32.mxu0 0.0
        %348 = vmatmul.mubr.f32.gmra.mrb[0].mxu0 %v249
        %v349 = vpop.f32.mrb[0].mxu0
        %v350 = vadd.f32 %v276, %v349
        %v351 = vpop.f32.mrb[0].mxu0
        %352 = vmatprep.mubr.f32.mxu0 0.0
        %353 = vmatmul.mubr.f32.gmra.mrb[0].mxu0 %v250
        %v354 = vpop.f32.mrb[0].mxu0
        %v355 = vadd.f32 %v276, %v354
        %v356 = vpop.f32.mrb[0].mxu0
        %357 = vmatprep.mubr.f32.mxu0 0.0
        %358 = vmatmul.mubr.f32.gmra.mrb[0].mxu0 %v251
        %v359 = vpop.f32.mrb[0].mxu0
        %v360 = vadd.f32 %v276, %v359
        %v361 = vpop.f32.mrb[0].mxu0
        %362 = vmatprep.mubr.f32.mxu0 0.0
        %363 = vmatmul.mubr.f32.gmra.mrb[0].mxu0 %v252
        %v364 = vpop.f32.mrb[0].mxu0
        %v365 = vadd.f32 %v276, %v364
        %v366 = vpop.f32.mrb[0].mxu0
        %367 = vmatprep.mubr.f32.mxu0 0.0
        %368 = vmatmul.mubr.f32.gmra.mrb[0].mxu0 %v253
        %v369 = vpop.f32.mrb[0].mxu0
        %v370 = vadd.f32 %v276, %v369
        %v371 = vpop.f32.mrb[0].mxu0
        %372 = vmatprep.mubr.f32.mxu0 0.0
        %373 = vmatmul.mubr.f32.gmra.mrb[0].mxu0 %v254
        %v374 = vpop.f32.mrb[0].mxu0
        %v375 = vadd.f32 %v276, %v374
        %v376 = vpop.f32.mrb[0].mxu0
        %377 = vdwg.mxu0
        %v378 = vmax.f32 %v345, 0.0
        %v379 = vmax.f32 %v350, 0.0
        %v380 = vmax.f32 %v355, 0.0
        %v381 = vmax.f32 %v360, 0.0
        %v382 = vmax.f32 %v365, 0.0
        %v383 = vmax.f32 %v370, 0.0
        %v384 = vmax.f32 %v375, 0.0
        %v385 = vld [vmem:[%s3] sm:$0xff]
        %v386 = vld [vmem:[%s3 + $0x8] sm:$0xff]
        %v387 = vld [vmem:[%s3 + $0x10] sm:$0xff]
        %v388 = vld [vmem:[%s3 + $0x18] sm:$0xff]
        %v389 = vld [vmem:[%s3 + $0x20] sm:$0xff]
        %v390 = vld [vmem:[%s3 + $0x28] sm:$0xff]
        %v391 = vld [vmem:[%s3 + $0x30] sm:$0xff]
        %v392 = vld [vmem:[%s3 + $0x38] sm:$0xff]
        %v393 = vld [vmem:[#allocation2] sm:$0x1]
        %v395 = vlaneseq
        %v396 = vshrl.u32 %v395, 7
        %v397 = vsub.s32 0, %v396
        %v398 = vrot.slane %v393, %v397
        %vm400 = vcmask 523264
        %v402 = vsel %vm400, %v378, 0
        %v405 = vsel %vm400, %v379, 0
        %v408 = vsel %vm400, %v380, 0
        %v411 = vsel %vm400, %v381, 0
        %v414 = vsel %vm400, %v382, 0
        %v417 = vsel %vm400, %v383, 0
        %v420 = vsel %vm400, %v384, 0
        %422 = vmatprep.subr.mxu0 0.0
        %423 = vmatpush1.msra.mxu0 %v385
        %424 = vmatprep.subr.mxu0 0.0
        %425 = vmatpush1.msra.mxu0 %v386
        %426 = vmatprep.subr.mxu0 0.0
        %427 = vmatpush1.msra.mxu0 %v387
        %428 = vmatprep.subr.mxu0 0.0
        %429 = vmatpush1.msra.mxu0 %v388
        %430 = vmatprep.subr.mxu0 0.0
        %431 = vmatpush1.msra.mxu0 %v389
        %432 = vmatprep.subr.mxu0 0.0
        %433 = vmatpush1.msra.mxu0 %v390
        %434 = vmatprep.subr.mxu0 0.0
        %435 = vmatpush1.msra.mxu0 %v391
        %436 = vmatprep.subr.mxu0 0.0
        %437 = vmatpush1.msra.mxu0 %v392
        %438 = vmatprep.subr.mxu0 0.0
        %439 = vmatpush1.msra.mxu0 0.0
        %440 = vmatprep.subr.mxu0 0.0
        %441 = vmatpush1.msra.mxu0 0.0
        %442 = vmatprep.subr.mxu0 0.0
        %443 = vmatpush1.msra.mxu0 0.0
        %444 = vmatprep.subr.mxu0 0.0
        %445 = vmatpush1.msra.mxu0 0.0
        %446 = vmatprep.subr.mxu0 0.0
        %447 = vmatpush1.msra.mxu0 0.0
        %448 = vmatprep.subr.mxu0 0.0
        %449 = vmatpush1.msra.mxu0 0.0
        %450 = vmatprep.subr.mxu0 0.0
        %451 = vmatpush1.msra.mxu0 0.0
        %452 = vmatprep.subr.mxu0 0.0
        %453 = vmatpush1.msra.mxu0 0.0
        %454 = vmatprep.subr.mxu0 0.0
        %455 = vmatpush1.msra.mxu0 0.0
        %456 = vmatprep.subr.mxu0 0.0
        %457 = vmatpush1.msra.mxu0 0.0
        %458 = vmatprep.subr.mxu0 0.0
        %459 = vmatpush1.msra.mxu0 0.0
        %460 = vmatprep.subr.mxu0 0.0
        %461 = vmatpush1.msra.mxu0 0.0
        %462 = vmatprep.subr.mxu0 0.0
        %463 = vmatpush1.msra.mxu0 0.0
        %464 = vmatprep.subr.mxu0 0.0
        %465 = vmatpush1.msra.mxu0 0.0
        %466 = vmatprep.subr.mxu0 0.0
        %467 = vmatpush1.msra.mxu0 0.0
        %468 = vmatprep.subr.mxu0 0.0
        %469 = vmatpush1.msra.mxu0 0.0
        %470 = vmatprep.subr.mxu0 0.0
        %471 = vmatpush1.msra.mxu0 0.0
        %472 = vmatprep.subr.mxu0 0.0
        %473 = vmatpush1.msra.mxu0 0.0
        %474 = vmatprep.subr.mxu0 0.0
        %475 = vmatpush1.msra.mxu0 0.0
        %476 = vmatprep.subr.mxu0 0.0
        %477 = vmatpush1.msra.mxu0 0.0
        %478 = vmatprep.subr.mxu0 0.0
        %479 = vmatpush1.msra.mxu0 0.0
        %480 = vmatprep.subr.mxu0 0.0
        %481 = vmatpush1.msra.mxu0 0.0
        %482 = vmatprep.subr.mxu0 0.0
        %483 = vmatpush1.msra.mxu0 0.0
        %484 = vmatprep.subr.mxu0 0.0
        %485 = vmatpush1.msra.mxu0 0.0
        %486 = vmatprep.mubr.f32.mxu0 0.0
        %487 = vmatmul.mubr.f32.gmra.mrb[0].mxu0 %v402
        %v488 = vpop.f32.mrb[0].mxu0
        %v489 = vadd.f32 %v398, %v488
        %v490 = vpop.f32.mrb[0].mxu0
        %491 = vmatprep.mubr.f32.mxu0 0.0
        %492 = vmatmul.mubr.f32.gmra.mrb[0].mxu0 %v405
        %v493 = vpop.f32.mrb[0].mxu0
        %v494 = vadd.f32 %v398, %v493
        %v495 = vpop.f32.mrb[0].mxu0
        %496 = vmatprep.mubr.f32.mxu0 0.0
        %497 = vmatmul.mubr.f32.gmra.mrb[0].mxu0 %v408
        %v498 = vpop.f32.mrb[0].mxu0
        %v499 = vadd.f32 %v398, %v498
        %v500 = vpop.f32.mrb[0].mxu0
        %501 = vmatprep.mubr.f32.mxu0 0.0
        %502 = vmatmul.mubr.f32.gmra.mrb[0].mxu0 %v411
        %v503 = vpop.f32.mrb[0].mxu0
        %v504 = vadd.f32 %v398, %v503
        %v505 = vpop.f32.mrb[0].mxu0
        %506 = vmatprep.mubr.f32.mxu0 0.0
        %507 = vmatmul.mubr.f32.gmra.mrb[0].mxu0 %v414
        %v508 = vpop.f32.mrb[0].mxu0
        %v509 = vadd.f32 %v398, %v508
        %v510 = vpop.f32.mrb[0].mxu0
        %511 = vmatprep.mubr.f32.mxu0 0.0
        %512 = vmatmul.mubr.f32.gmra.mrb[0].mxu0 %v417
        %v513 = vpop.f32.mrb[0].mxu0
        %v514 = vadd.f32 %v398, %v513
        %v515 = vpop.f32.mrb[0].mxu0
        %516 = vmatprep.mubr.f32.mxu0 0.0
        %517 = vmatmul.mubr.f32.gmra.mrb[0].mxu0 %v420
        %v518 = vpop.f32.mrb[0].mxu0
        %v519 = vadd.f32 %v398, %v518
        %v520 = vpop.f32.mrb[0].mxu0
        %521 = vdwg.mxu0
        %v522 = vsub.f32 0.0, %v489
        %v523 = vsub.f32 0.0, %v494
        %v524 = vsub.f32 0.0, %v499
        %v525 = vsub.f32 0.0, %v504
        %v526 = vsub.f32 0.0, %v509
        %v527 = vsub.f32 0.0, %v514
        %v528 = vsub.f32 0.0, %v519
        %v529 = vmul.f32 %v522, 1.442695
        %v530 = vpow.pop %v529
        %v531 = vmul.f32 %v523, 1.442695
        %v532 = vpow.pop %v531
        %v533 = vmul.f32 %v524, 1.442695
        %v534 = vpow.pop %v533
        %v535 = vmul.f32 %v525, 1.442695
        %v536 = vpow.pop %v535
        %v537 = vmul.f32 %v526, 1.442695
        %v538 = vpow.pop %v537
        %v539 = vmul.f32 %v527, 1.442695
        %v540 = vpow.pop %v539
        %v541 = vmul.f32 %v528, 1.442695
        %v542 = vpow.pop %v541
        %v543 = vadd.f32 %v530, 1.0
        %v544 = vadd.f32 %v532, 1.0
        %v545 = vadd.f32 %v534, 1.0
        %v546 = vadd.f32 %v536, 1.0
        %v547 = vadd.f32 %v538, 1.0
        %v548 = vadd.f32 %v540, 1.0
        %v549 = vadd.f32 %v542, 1.0
        %v550 = vrcp.pop %v543
        %v551 = vmul.f32 1.0, %v550
        %v552 = vrcp.pop %v544
        %v553 = vmul.f32 1.0, %v552
        %v554 = vrcp.pop %v545
        %v555 = vmul.f32 1.0, %v554
        %v556 = vrcp.pop %v546
        %v557 = vmul.f32 1.0, %v556
        %v558 = vrcp.pop %v547
        %v559 = vmul.f32 1.0, %v558
        %v560 = vrcp.pop %v548
        %v561 = vmul.f32 1.0, %v560
        %v562 = vrcp.pop %v549
        %v563 = vmul.f32 1.0, %v562
        %v564 = vlaneseq
        %v565 = vand.u32 %v564, 127
        %vm566 = vcmp.eq.s32.totalorder %v565, 0
        %v567 = vsub.f32 1.0, %v551
        %v568 = vsub.f32 1.0, %v553
        %v569 = vsub.f32 1.0, %v555
        %v570 = vsub.f32 1.0, %v557
        %v571 = vsub.f32 1.0, %v559
        %v572 = vsub.f32 1.0, %v561
        %v573 = vsub.f32 1.0, %v563
        %575 = vset.pattern.permute.xlu0 0
        %576 = vperm.xlu0 %575, %v551
        %v577 = vpop.permute.xlu0 %576
        %580 = vset.pattern.permute.xlu0 0
        %581 = vperm.xlu0 %580, %v553
        %v582 = vpop.permute.xlu0 %581
        %585 = vset.pattern.permute.xlu0 0
        %586 = vperm.xlu0 %585, %v555
        %v587 = vpop.permute.xlu0 %586
        %590 = vset.pattern.permute.xlu0 0
        %591 = vperm.xlu0 %590, %v557
        %v592 = vpop.permute.xlu0 %591
        %595 = vset.pattern.permute.xlu0 0
        %596 = vperm.xlu0 %595, %v559
        %v597 = vpop.permute.xlu0 %596
        %600 = vset.pattern.permute.xlu0 0
        %601 = vperm.xlu0 %600, %v561
        %v602 = vpop.permute.xlu0 %601
        %605 = vset.pattern.permute.xlu0 0
        %606 = vperm.xlu0 %605, %v563
        %v607 = vpop.permute.xlu0 %606
        %610 = vset.pattern.permute.xlu0 0
        %611 = vperm.xlu0 %610, %v567
        %v612 = vpop.permute.xlu0 %611
        %615 = vset.pattern.permute.xlu0 0
        %616 = vperm.xlu0 %615, %v568
        %v617 = vpop.permute.xlu0 %616
        %620 = vset.pattern.permute.xlu0 0
        %621 = vperm.xlu0 %620, %v569
        %v622 = vpop.permute.xlu0 %621
        %625 = vset.pattern.permute.xlu0 0
        %626 = vperm.xlu0 %625, %v570
        %v627 = vpop.permute.xlu0 %626
        %630 = vset.pattern.permute.xlu0 0
        %631 = vperm.xlu0 %630, %v571
        %v632 = vpop.permute.xlu0 %631
        %635 = vset.pattern.permute.xlu0 0
        %636 = vperm.xlu0 %635, %v572
        %v637 = vpop.permute.xlu0 %636
        %640 = vset.pattern.permute.xlu0 0
        %641 = vperm.xlu0 %640, %v573
        %v642 = vpop.permute.xlu0 %641
        %v644 = vsel %vm566, %v577, %v612
        %v645 = vsel %vm566, %v582, %v617
        %v646 = vsel %vm566, %v587, %v622
        %v647 = vsel %vm566, %v592, %v627
        %v648 = vsel %vm566, %v597, %v632
        %v649 = vsel %vm566, %v602, %v637
        %v650 = vsel %vm566, %v607, %v642
        %vm651 = vcmask 15360
        %652 = vst.msk [vmem:[%s228] sm:$0xff] %vm651, %v644
        %653 = vst.msk [vmem:[%s228 + $0x8] sm:$0xff] %vm651, %v645
        %654 = vst.msk [vmem:[%s228 + $0x10] sm:$0xff] %vm651, %v646
        %655 = vst.msk [vmem:[%s228 + $0x18] sm:$0xff] %vm651, %v647
        %656 = vst.msk [vmem:[%s228 + $0x20] sm:$0xff] %vm651, %v648
        %657 = vst.msk [vmem:[%s228 + $0x28] sm:$0xff] %vm651, %v649
        %658 = vst.msk [vmem:[%s228 + $0x30] sm:$0xff] %vm651, %v650
        %s659 = sand.u32 %s136, 1
        %s660 = sand.u32 %s136, 1
        %s661 = smul.addr %s660, 56
        %s662 = scalar_lea.vmem [#allocation3], %s661
        // Predicated region
        $region41: #{tpu_custom_call.1} parent=39 // pred_check
          %p663 = pneg %p146
        $region42: #{tpu_custom_call.1} parent=39 // pred_check_branch
          %665 = sbr.rel (%p663) target = $region44
        $region43: #{tpu_custom_call.1} parent=39 // pred_region
          %s666 = smul.u32 7, %s18
          %s667 = ssub.s32 13, %s666
          %p668 = scmp.lt.s32.totalorder %s667, 7
          %s669 = scalar_select %p668, %s667, 7
          %s670 = smul.u32 128, %s669
          %p671 = scmp.ne.s32.totalorder 0, %s670
          %s672 = smul.addr %s666, 8
          %s673 = scalar_lea.vmem %s5, %s672
          // Predicated region
          $region45: #{tpu_custom_call.1} parent=43 // pred_check
            %p674 = pneg %p671
          $region46: #{tpu_custom_call.1} parent=43 // pred_check_branch
            %676 = sbr.rel (%p674) target = $region48
          $region47: #{tpu_custom_call.1} parent=43 // pred_region
            // Predicated region
            $region49: #{tpu_custom_call.1} parent=47 // pred_check
              _
            $region50: #{tpu_custom_call.1} parent=47 // pred_check_branch
              %678 = sbr.rel (0) target = $region52
            $region51: #{tpu_custom_call.1} parent=47 // pred_region
              // Predicated region
              $region71: #{tpu_custom_call.1} parent=51 // pred_check
                _
              $region72: #{tpu_custom_call.1} parent=51 // pred_check_branch
                %740 = sbr.rel (0) target = $region74
              $region73: #{tpu_custom_call.1} parent=51 // pred_region
                %s741 = sdiv.u32.pop %s669, 7
                %s742 = srem.u32.pop %s669, 7
                // While loop
                $region75: #{tpu_custom_call.1} parent=73 // loop_pre_header
                  _
                $region76: #{tpu_custom_call.1} parent=73 // loop_header
                  %s744 = sphi 0, %s746
                  %p745 = scmp.ge.s32.totalorder %s744, %s741
                  %s749 = sphi 0, %s768
                  %s750 = sphi %s662, %s771
                  %s751 = sphi %s673, %s772
                $region77: #{tpu_custom_call.1} parent=73 // loop_header_branch
                  %748 = sbr.rel (%p745) target = $region81
                $region78: #{tpu_custom_call.1} parent=73 // loop_body
                  %v752 = vld [vmem:[%s750] sm:$0xff]
                  %753 = vst [vmem:[%s751] sm:$0xff] %v752
                  %v754 = vld [vmem:[%s750 + $0x8] sm:$0xff]
                  %755 = vst [vmem:[%s751 + $0x8] sm:$0xff] %v754
                  %v756 = vld [vmem:[%s750 + $0x10] sm:$0xff]
                  %757 = vst [vmem:[%s751 + $0x10] sm:$0xff] %v756
                  %v758 = vld [vmem:[%s750 + $0x18] sm:$0xff]
                  %759 = vst [vmem:[%s751 + $0x18] sm:$0xff] %v758
                  %v760 = vld [vmem:[%s750 + $0x20] sm:$0xff]
                  %761 = vst [vmem:[%s751 + $0x20] sm:$0xff] %v760
                  %v762 = vld [vmem:[%s750 + $0x28] sm:$0xff]
                  %763 = vst [vmem:[%s751 + $0x28] sm:$0xff] %v762
                  %v764 = vld [vmem:[%s750 + $0x30] sm:$0xff]
                  %765 = vst [vmem:[%s751 + $0x30] sm:$0xff] %v764
                  %s766 = sadd.s32 1, %s749
                  %p767 = scmp.ge.s32.totalorder %s766, %s741
                  %s768 = scalar_select %p767, 0, %s766
                  %s769 = smul.u32 %s768, 56
                  %s770 = smul.u32 %s768, 56
                  %s771 = scalar_lea.vmem %s662, %s769 [#allocation3]
                  %s772 = scalar_lea.vmem %s673, %s770
                $region79: #{tpu_custom_call.1} parent=73 // loop_footer
                  %s746 = sadd.s32 %s744, 1
                $region80: #{tpu_custom_call.1} parent=73 // loop_footer_branch
                  %743 = sbr.rel target = $region76
                $region81: #{tpu_custom_call.1} parent=73 // loop_exit
                  _
                %s773 = sdiv.u32.pop %s669, 7
                %s774 = srem.u32.pop %s669, 7
                %s775 = smul.u32 %s773, 7
                %s776 = smul.u32 8, %s775
                %s777 = scalar_lea.vmem %s662, %s776 [#allocation3]
                %s778 = smul.u32 8, %s775
                %s779 = scalar_lea.vmem %s673, %s778
                // While loop
                $region82: #{tpu_custom_call.1} parent=73 // loop_pre_header
                  _
                $region83: #{tpu_custom_call.1} parent=73 // loop_header
                  %s781 = sphi 0, %s783
                  %p782 = scmp.ge.s32.totalorder %s781, %s774
                  %s786 = sphi 0, %s793
                  %s787 = sphi %s777, %s796
                  %s788 = sphi %s779, %s797
                $region84: #{tpu_custom_call.1} parent=73 // loop_header_branch
                  %785 = sbr.rel (%p782) target = $region88
                $region85: #{tpu_custom_call.1} parent=73 // loop_body
                  %v789 = vld [vmem:[%s787] sm:$0xff]
                  %790 = vst [vmem:[%s788] sm:$0xff] %v789
                  %s791 = sadd.s32 1, %s786
                  %p792 = scmp.ge.s32.totalorder %s791, %s774
                  %s793 = scalar_select %p792, 0, %s791
                  %s794 = smul.u32 %s793, 8
                  %s795 = smul.u32 %s793, 8
                  %s796 = scalar_lea.vmem %s777, %s794 [#allocation3]
                  %s797 = scalar_lea.vmem %s779, %s795
                $region86: #{tpu_custom_call.1} parent=73 // loop_footer
                  %s783 = sadd.s32 %s781, 1
                $region87: #{tpu_custom_call.1} parent=73 // loop_footer_branch
                  %780 = sbr.rel target = $region83
                $region88: #{tpu_custom_call.1} parent=73 // loop_exit
                  _
              $region74: #{tpu_custom_call.1} parent=51 // pred_fallthru
                _
              // Predicated region
              $region89: #{tpu_custom_call.1} parent=51 // pred_check
                _
              $region90: #{tpu_custom_call.1} parent=51 // pred_check_branch
                %799 = sbr.rel target = $region92
              $region91: #{tpu_custom_call.1} parent=51 // pred_region
                _
              $region92: #{tpu_custom_call.1} parent=51 // pred_fallthru
                _
            $region52: #{tpu_custom_call.1} parent=47 // pred_fallthru
              _
            // Predicated region
            $region53: #{tpu_custom_call.1} parent=47 // pred_check
              _
            $region54: #{tpu_custom_call.1} parent=47 // pred_check_branch
              %680 = sbr.rel target = $region56
            $region55: #{tpu_custom_call.1} parent=47 // pred_region
              %s682 = sdiv.u32.pop %s669, 7
              %s683 = srem.u32.pop %s669, 7
              // While loop
              $region57: #{tpu_custom_call.1} parent=55 // loop_pre_header
                _
              $region58: #{tpu_custom_call.1} parent=55 // loop_header
                %s685 = sphi 0, %s687
                %p686 = scmp.ge.s32.totalorder %s685, %s682
                %s690 = sphi 0, %s709
                %s691 = sphi %s662, %s712
                %s692 = sphi %s673, %s713
              $region59: #{tpu_custom_call.1} parent=55 // loop_header_branch
                %689 = sbr.rel (%p686) target = $region63
              $region60: #{tpu_custom_call.1} parent=55 // loop_body
                %v693 = vld [vmem:[%s691] sm:$0xff]
                %694 = vst [vmem:[%s692] sm:$0xff] %v693
                %v695 = vld [vmem:[%s691 + $0x8] sm:$0xff]
                %696 = vst [vmem:[%s692 + $0x8] sm:$0xff] %v695
                %v697 = vld [vmem:[%s691 + $0x10] sm:$0xff]
                %698 = vst [vmem:[%s692 + $0x10] sm:$0xff] %v697
                %v699 = vld [vmem:[%s691 + $0x18] sm:$0xff]
                %700 = vst [vmem:[%s692 + $0x18] sm:$0xff] %v699
                %v701 = vld [vmem:[%s691 + $0x20] sm:$0xff]
                %702 = vst [vmem:[%s692 + $0x20] sm:$0xff] %v701
                %v703 = vld [vmem:[%s691 + $0x28] sm:$0xff]
                %704 = vst [vmem:[%s692 + $0x28] sm:$0xff] %v703
                %v705 = vld [vmem:[%s691 + $0x30] sm:$0xff]
                %706 = vst [vmem:[%s692 + $0x30] sm:$0xff] %v705
                %s707 = sadd.s32 1, %s690
                %p708 = scmp.ge.s32.totalorder %s707, %s682
                %s709 = scalar_select %p708, 0, %s707
                %s710 = smul.u32 %s709, 56
                %s711 = smul.u32 %s709, 56
                %s712 = scalar_lea.vmem %s662, %s710 [#allocation3]
                %s713 = scalar_lea.vmem %s673, %s711
              $region61: #{tpu_custom_call.1} parent=55 // loop_footer
                %s687 = sadd.s32 %s685, 1
              $region62: #{tpu_custom_call.1} parent=55 // loop_footer_branch
                %684 = sbr.rel target = $region58
              $region63: #{tpu_custom_call.1} parent=55 // loop_exit
                _
              %s714 = sdiv.u32.pop %s669, 7
              %s715 = srem.u32.pop %s669, 7
              %s716 = smul.u32 %s714, 7
              %s717 = smul.u32 8, %s716
              %s718 = scalar_lea.vmem %s662, %s717 [#allocation3]
              %s719 = smul.u32 8, %s716
              %s720 = scalar_lea.vmem %s673, %s719
              // While loop
              $region64: #{tpu_custom_call.1} parent=55 // loop_pre_header
                _
              $region65: #{tpu_custom_call.1} parent=55 // loop_header
                %s722 = sphi 0, %s724
                %p723 = scmp.ge.s32.totalorder %s722, %s715
                %s727 = sphi 0, %s734
                %s728 = sphi %s718, %s737
                %s729 = sphi %s720, %s738
              $region66: #{tpu_custom_call.1} parent=55 // loop_header_branch
                %726 = sbr.rel (%p723) target = $region70
              $region67: #{tpu_custom_call.1} parent=55 // loop_body
                %v730 = vld [vmem:[%s728] sm:$0xff]
                %731 = vst [vmem:[%s729] sm:$0xff] %v730
                %s732 = sadd.s32 1, %s727
                %p733 = scmp.ge.s32.totalorder %s732, %s715
                %s734 = scalar_select %p733, 0, %s732
                %s735 = smul.u32 %s734, 8
                %s736 = smul.u32 %s734, 8
                %s737 = scalar_lea.vmem %s718, %s735 [#allocation3]
                %s738 = scalar_lea.vmem %s720, %s736
              $region68: #{tpu_custom_call.1} parent=55 // loop_footer
                %s724 = sadd.s32 %s722, 1
              $region69: #{tpu_custom_call.1} parent=55 // loop_footer_branch
                %721 = sbr.rel target = $region65
              $region70: #{tpu_custom_call.1} parent=55 // loop_exit
                _
            $region56: #{tpu_custom_call.1} parent=47 // pred_fallthru
              _
          $region48: #{tpu_custom_call.1} parent=43 // pred_fallthru
            _
          %800 = vnop
        $region44: #{tpu_custom_call.1} parent=39 // pred_fallthru
          _
      $region40: #{tpu_custom_call.1} parent=5 // pred_fallthru
        _
      %p801 = scmp.le.s32.totalorder 2, %s13
      // Predicated region
      $region93: #{tpu_custom_call.1} parent=5 // pred_check
        %p802 = pneg %p801
      $region94: #{tpu_custom_call.1} parent=5 // pred_check_branch
        %804 = sbr.rel (%p802) target = $region96
      $region95: #{tpu_custom_call.1} parent=5 // pred_region
        %s805 = ssub.s32 %s13, 2
        // Predicated region
        $region97: #{tpu_custom_call.1} parent=95 // pred_check
          %p806 = pneg %p152
        $region98: #{tpu_custom_call.1} parent=95 // pred_check_branch
          %808 = sbr.rel (%p806) target = $region100
        $region99: #{tpu_custom_call.1} parent=95 // pred_region
          %s809 = sand.u32 %s137, 1
          %s810 = sand.u32 %s137, 1
          %s811 = smul.addr %s810, 56
          %s812 = scalar_lea.vmem [#allocation3], %s811
        $region100: #{tpu_custom_call.1} parent=95 // pred_fallthru
          _
      $region96: #{tpu_custom_call.1} parent=5 // pred_fallthru
        _
    $region6: #{tpu_custom_call.1} parent=1 // loop_footer
      %s17 = sadd.s32 1, %s13
    $region7: #{tpu_custom_call.1} parent=1 // loop_footer_branch
      %12 = sbr.rel target = $region3
    $region8: #{tpu_custom_call.1} parent=1 // loop_exit
      _

</llo_original>
